<compile_context>
chip_gen: v5e
topology: v5e:2x2
jax: 0.10.0
libtpu: 0.0.40
codegen_flags: <defaults>
</compile_context>

<pallas_src>
import functools
import itertools

import numpy as np
import jax
import jax.numpy as jnp
from jax.experimental import pallas as pl
from jax.experimental.pallas import tpu as pltpu

_EPS = 1e-7

try:  # prefer exact Hungarian if available on the host
    from scipy.optimize import linear_sum_assignment as _scipy_lsa
except Exception:  # pragma: no cover
    _scipy_lsa = None


def _round_up(x, m):
    return ((x + m - 1) // m) * m


def _matcher_cost_kernel(logits_ref, pm_ref, obox_ref, tbox_ref, c_ref,
                         *, cost_bbox, cost_giou):
    # --- classification cost -------------------------------------------------
    # softmax over classes in f32; matmul against the (-cost_class)-scaled
    # positive map in bf16 (scaling already folded in the wrapper).
    logits = logits_ref[...].astype(jnp.float32)                      # (tn, C)
    m = jnp.max(logits, axis=-1, keepdims=True)
    e = jnp.exp(logits - m)
    prob = e * pl.reciprocal(jnp.sum(e, axis=-1, keepdims=True), approx=True)
    c_class = jnp.dot(prob.astype(jnp.bfloat16), pm_ref[...],
                      preferred_element_type=jnp.float32)             # (tn, Tp)

    # --- box costs ------------------------------------------------------------
    ob = obox_ref[...].astype(jnp.float32)                            # (tn, 4)
    tb = tbox_ref[...].astype(jnp.float32)                            # (4, Tp)
    ocx, ocy, ow, oh = ob[:, 0:1], ob[:, 1:2], ob[:, 2:3], ob[:, 3:4]  # (tn,1)
    tcx, tcy, tw, th = tb[0:1, :], tb[1:2, :], tb[2:3, :], tb[3:4, :]  # (1,Tp)

    # L1 cdist on cxcywh, broadcast (tn,1) x (1,Tp) -> (tn,Tp)
    c_bbox = (jnp.abs(ocx - tcx) + jnp.abs(ocy - tcy)
              + jnp.abs(ow - tw) + jnp.abs(oh - th))

    # cxcywh -> xyxy
    ox0, oy0 = ocx - 0.5 * ow, ocy - 0.5 * oh
    ox1, oy1 = ocx + 0.5 * ow, ocy + 0.5 * oh
    tx0, ty0 = tcx - 0.5 * tw, tcy - 0.5 * th
    tx1, ty1 = tcx + 0.5 * tw, tcy + 0.5 * th

    area_o = (ox1 - ox0) * (oy1 - oy0)                                # (tn,1)
    area_t = (tx1 - tx0) * (ty1 - ty0)                                # (1,Tp)

    # pairwise IoU (eps-clamped denominators -> padded/degenerate boxes stay finite)
    iw = jnp.maximum(jnp.minimum(ox1, tx1) - jnp.maximum(ox0, tx0), 0.0)
    ih = jnp.maximum(jnp.minimum(oy1, ty1) - jnp.maximum(oy0, ty0), 0.0)
    inter = iw * ih
    union = area_o + area_t - inter
    iou = inter * pl.reciprocal(jnp.maximum(union, _EPS), approx=True)

    # smallest enclosing box; giou = iou - (earea - union)/earea = iou - 1 + union/earea
    ew = jnp.maximum(jnp.maximum(ox1, tx1) - jnp.minimum(ox0, tx0), 0.0)
    eh = jnp.maximum(jnp.maximum(oy1, ty1) - jnp.minimum(oy0, ty0), 0.0)
    earea = ew * eh
    enc_frac = union * pl.reciprocal(jnp.maximum(earea, _EPS), approx=True)

    # -cost_giou * giou == cost_giou * (1 - iou - union/earea)
    c_ref[...] = (cost_bbox * c_bbox + c_class
                  + cost_giou * (1.0 - iou - enc_frac))


def compute_cost_matrix(pred_logits, pred_boxes, positive_map, tgt_boxes,
                        cost_class=1.0, cost_bbox=1.0, cost_giou=1.0,
                        tile_n=512):
    """Returns cost matrix C of shape (bs, num_queries, total_targets)."""
    bs, nq, nc = pred_logits.shape
    n = bs * nq
    t = int(tgt_boxes.shape[0])

    # Row tile: multiple of 8, capped at 512 (fits comfortably in the 32 MiB
    # scoped-VMEM budget even with double-buffering on v7x's 64 MiB VMEM).
    tile = min(int(tile_n), _round_up(n, 8))
    n_pad = _round_up(n, tile)
    t_pad = _round_up(max(t, 1), 128)   # lane-dense output stores / MXU N-dim

    logits = pred_logits.reshape(n, nc).astype(jnp.float32)
    obox = pred_boxes.reshape(n, 4).astype(jnp.float32)
    # Fold -cost_class into the (C, T) positive map once (cheap), feed MXU bf16.
    pm_t = (-float(cost_class)) * jnp.transpose(positive_map).astype(jnp.float32)
    tbox_t = jnp.transpose(tgt_boxes).astype(jnp.float32)             # (4, T)

    logits = jnp.pad(logits, ((0, n_pad - n), (0, 0)))
    obox = jnp.pad(obox, ((0, n_pad - n), (0, 0)))
    pm_t = jnp.pad(pm_t, ((0, 0), (0, t_pad - t))).astype(jnp.bfloat16)
    tbox_t = jnp.pad(tbox_t, ((0, 0), (0, t_pad - t)))

    kernel = functools.partial(_matcher_cost_kernel,
                               cost_bbox=float(cost_bbox),
                               cost_giou=float(cost_giou))

    c_flat = pl.pallas_call(
        kernel,
        out_shape=jax.ShapeDtypeStruct((n_pad, t_pad), jnp.float32),
        grid=(n_pad // tile,),
        in_specs=[
            pl.BlockSpec((tile, nc), lambda i: (i, 0)),      # logits row tile
            pl.BlockSpec((nc, t_pad), lambda i: (0, 0)),     # scaled pos-map (bf16)
            pl.BlockSpec((tile, 4), lambda i: (i, 0)),       # pred boxes row tile
            pl.BlockSpec((4, t_pad), lambda i: (0, 0)),      # target boxes
        ],
        out_specs=pl.BlockSpec((tile, t_pad), lambda i: (i, 0)),
        compiler_params=pltpu.CompilerParams(
            dimension_semantics=("parallel",),               # v7x: shard tiles on 2 TCs
            vmem_limit_bytes=32 * 1024 * 1024),
    )(logits, pm_t, obox, tbox_t)

    return c_flat[:n, :t].reshape(bs, nq, t)


def _linear_sum_assignment_small(cost):
    """Exact minimum-cost assignment; scipy Hungarian if available, else brute force."""
    if _scipy_lsa is not None:
        r, c = _scipy_lsa(cost)
        return np.asarray(r, dtype=np.int64), np.asarray(c, dtype=np.int64)
    # TODO(synk): scipy.optimize.linear_sum_assignment (Hungarian) is a sequential,
    # data-dependent host algorithm with no clean Pallas equivalent; exact brute
    # force below matches its optimum for the small demo sizes only.
    n_rows, n_cols = cost.shape
    best_rows, best_cols, best_val = None, None, np.inf
    if n_rows >= n_cols:
        cols = np.arange(n_cols)
        for rows in itertools.permutations(range(n_rows), n_cols):
            v = cost[list(rows), cols].sum()
            if v < best_val:
                best_val, best_rows, best_cols = v, np.array(rows), cols.copy()
    else:
        rows = np.arange(n_rows)
        for cols in itertools.permutations(range(n_cols), n_rows):
            v = cost[rows, list(cols)].sum()
            if v < best_val:
                best_val, best_rows, best_cols = v, rows.copy(), np.array(cols)
    order = np.argsort(best_rows)
    return best_rows[order].astype(np.int64), best_cols[order].astype(np.int64)


def hungarian_matcher(pred_logits, pred_boxes, positive_map, targets,
                      cost_class=1.0, cost_bbox=1.0, cost_giou=1.0):
    """JAX/Pallas port of HungarianMatcher.forward (standard, non-MoE branch)."""
    # TODO(synk): the `len(pred_logits) == 4` MoE-fusion branch (4-way chunked
    # positive_map, averaged class cost) is not implemented here.
    tgt_boxes = jnp.concatenate([v["boxes"] for v in targets], axis=0)
    sizes = [int(v["boxes"].shape[0]) for v in targets]

    c = compute_cost_matrix(pred_logits, pred_boxes, positive_map, tgt_boxes,
                            cost_class, cost_bbox, cost_giou)
    c = jax.block_until_ready(c)
    c_np = np.asarray(jax.device_get(c))        # one transfer for the whole batch

    indices = []
    offset = 0
    for i, sz in enumerate(sizes):
        sub = c_np[i, :, offset:offset + sz]
        indices.append(_linear_sum_assignment_small(sub))
        offset += sz
    return indices


if __name__ == "__main__":
    key = jax.random.PRNGKey(0)
    bs, num_queries, num_classes = 2, 8, 32
    sizes = [2, 3]                               # targets per image
    total_t = sum(sizes)

    k1, k2, k3, k4, k5, k6 = jax.random.split(key, 6)
    pred_logits = jax.random.normal(k1, (bs, num_queries, num_classes), jnp.float32)

    p_cxcy = jax.random.uniform(k2, (bs, num_queries, 2), minval=0.25, maxval=0.75)
    p_wh = jax.random.uniform(k3, (bs, num_queries, 2), minval=0.05, maxval=0.30)
    pred_boxes = jnp.concatenate([p_cxcy, p_wh], axis=-1)

    t_cxcy = jax.random.uniform(k4, (total_t, 2), minval=0.25, maxval=0.75)
    t_wh = jax.random.uniform(k5, (total_t, 2), minval=0.05, maxval=0.30)
    all_tgt_boxes = jnp.concatenate([t_cxcy, t_wh], axis=-1)

    labels = jax.random.randint(k6, (total_t,), 0, num_classes)
    positive_map = jax.nn.one_hot(labels, num_classes, dtype=jnp.float32)  # (T, C)

    targets = []
    off = 0
    for sz in sizes:
        targets.append({"boxes": all_tgt_boxes[off:off + sz],
                        "labels": labels[off:off + sz]})
        off += sz

    indices = hungarian_matcher(pred_logits, pred_boxes, positive_map, targets,
                                cost_class=1.0, cost_bbox=1.0, cost_giou=1.0)

    # Sanity: each batch element gets min(num_queries, num_targets) unique matches.
    for (ri, ci), sz in zip(indices, sizes):
        assert len(ri) == len(ci) == min(num_queries, sz)
        assert len(set(ri.tolist())) == len(ri)
        assert len(set(ci.tolist())) == len(ci)

    # Sanity: cost matrix is finite everywhere (eps-clamped denominators).
    c_check = compute_cost_matrix(pred_logits, pred_boxes, positive_map,
                                  all_tgt_boxes)
    assert bool(jnp.all(jnp.isfinite(c_check)))

    print("KERNEL_OK")
</pallas_src>

<mosaic_0001>
module attributes {stable_mosaic.version = 11 : i64} {
  func.func @_matcher_cost_kernel(%arg0: i32, %arg1: memref<16x32xf32, #tpu.memory_space<vmem>>, %arg2: memref<32x128xbf16, #tpu.memory_space<vmem>>, %arg3: memref<16x4xf32, #tpu.memory_space<vmem>>, %arg4: memref<4x128xf32, #tpu.memory_space<vmem>>, %arg5: memref<16x128xf32, #tpu.memory_space<vmem>>) attributes {dimension_semantics = [#tpu.dimension_semantics<parallel>], iteration_bounds = array<i64: 1>, scalar_prefetch = 0 : i64, scratch_operands = 0 : i64, tpu.core_type = #tpu.core_type<tc>, window_params = [{transform_indices = @transform_0, window_bounds = array<i64: 16, 32>}, {pipeline_mode = #tpu.pipeline_mode<synchronous>, transform_indices = @transform_1, window_bounds = array<i64: 32, 128>}, {transform_indices = @transform_2, window_bounds = array<i64: 16, 4>}, {pipeline_mode = #tpu.pipeline_mode<synchronous>, transform_indices = @transform_3, window_bounds = array<i64: 4, 128>}, {transform_indices = @transform_4, window_bounds = array<i64: 16, 128>}]} {
    %c0 = arith.constant 0 : index
    %c0_0 = arith.constant 0 : index
    %0 = vector.load %arg1[%c0, %c0_0] : memref<16x32xf32, #tpu.memory_space<vmem>>, vector<16x32xf32>
    %cst = arith.constant dense<0xFF800000> : vector<16xf32>
    %1 = vector.multi_reduction <maximumf>, %0, %cst [1] : vector<16x32xf32> to vector<16xf32>
    %2 = vector.shape_cast %1 : vector<16xf32> to vector<16x1xf32>
    %3 = vector.broadcast %2 : vector<16x1xf32> to vector<16x32xf32>
    %4 = arith.subf %0, %3 : vector<16x32xf32>
    %5 = math.exp %4 : vector<16x32xf32>
    %cst_1 = arith.constant dense<0.000000e+00> : vector<16xf32>
    %6 = vector.multi_reduction <add>, %5, %cst_1 [1] : vector<16x32xf32> to vector<16xf32>
    %7 = vector.shape_cast %6 : vector<16xf32> to vector<16x1xf32>
    %8 = tpu.reciprocal %7 {approx = true} : vector<16x1xf32> -> vector<16x1xf32>
    %9 = vector.broadcast %8 : vector<16x1xf32> to vector<16x32xf32>
    %10 = arith.mulf %5, %9 : vector<16x32xf32>
    %11 = arith.truncf %10 : vector<16x32xf32> to vector<16x32xbf16>
    %c0_2 = arith.constant 0 : index
    %c0_3 = arith.constant 0 : index
    %12 = vector.load %arg2[%c0_2, %c0_3] : memref<32x128xbf16, #tpu.memory_space<vmem>>, vector<32x128xbf16>
    %cst_4 = arith.constant dense<0.000000e+00> : vector<16x128xf32>
    %13 = tpu.matmul %11, %12, %cst_4 {dimension_numbers = #tpu.dot_dimension_numbers<[1], [0], [0], [1], [0, 0, 1, 1], [], []>} : vector<16x32xbf16>, vector<32x128xbf16>, vector<16x128xf32> -> vector<16x128xf32>
    %c0_5 = arith.constant 0 : index
    %c0_6 = arith.constant 0 : index
    %14 = vector.load %arg3[%c0_5, %c0_6] : memref<16x4xf32, #tpu.memory_space<vmem>>, vector<16x4xf32>
    %c0_7 = arith.constant 0 : index
    %c0_8 = arith.constant 0 : index
    %15 = vector.load %arg4[%c0_7, %c0_8] : memref<4x128xf32, #tpu.memory_space<vmem>>, vector<4x128xf32>
    %16 = vector.extract_strided_slice %14 {offsets = [0, 0], sizes = [16, 1], strides = [1, 1]} : vector<16x4xf32> to vector<16x1xf32>
    %17 = vector.extract_strided_slice %14 {offsets = [0, 1], sizes = [16, 1], strides = [1, 1]} : vector<16x4xf32> to vector<16x1xf32>
    %18 = vector.extract_strided_slice %14 {offsets = [0, 2], sizes = [16, 1], strides = [1, 1]} : vector<16x4xf32> to vector<16x1xf32>
    %19 = vector.extract_strided_slice %14 {offsets = [0, 3], sizes = [16, 1], strides = [1, 1]} : vector<16x4xf32> to vector<16x1xf32>
    %20 = vector.extract_strided_slice %15 {offsets = [0, 0], sizes = [1, 128], strides = [1, 1]} : vector<4x128xf32> to vector<1x128xf32>
    %21 = vector.extract_strided_slice %15 {offsets = [1, 0], sizes = [1, 128], strides = [1, 1]} : vector<4x128xf32> to vector<1x128xf32>
    %22 = vector.extract_strided_slice %15 {offsets = [2, 0], sizes = [1, 128], strides = [1, 1]} : vector<4x128xf32> to vector<1x128xf32>
    %23 = vector.extract_strided_slice %15 {offsets = [3, 0], sizes = [1, 128], strides = [1, 1]} : vector<4x128xf32> to vector<1x128xf32>
    %24 = vector.broadcast %16 : vector<16x1xf32> to vector<16x128xf32>
    %25 = vector.broadcast %20 : vector<1x128xf32> to vector<16x128xf32>
    %26 = arith.subf %24, %25 : vector<16x128xf32>
    %27 = math.absf %26 : vector<16x128xf32>
    %28 = vector.broadcast %17 : vector<16x1xf32> to vector<16x128xf32>
    %29 = vector.broadcast %21 : vector<1x128xf32> to vector<16x128xf32>
    %30 = arith.subf %28, %29 : vector<16x128xf32>
    %31 = math.absf %30 : vector<16x128xf32>
    %32 = arith.addf %27, %31 : vector<16x128xf32>
    %33 = vector.broadcast %18 : vector<16x1xf32> to vector<16x128xf32>
    %34 = vector.broadcast %22 : vector<1x128xf32> to vector<16x128xf32>
    %35 = arith.subf %33, %34 : vector<16x128xf32>
    %36 = math.absf %35 : vector<16x128xf32>
    %37 = arith.addf %32, %36 : vector<16x128xf32>
    %38 = vector.broadcast %19 : vector<16x1xf32> to vector<16x128xf32>
    %39 = vector.broadcast %23 : vector<1x128xf32> to vector<16x128xf32>
    %40 = arith.subf %38, %39 : vector<16x128xf32>
    %41 = math.absf %40 : vector<16x128xf32>
    %42 = arith.addf %37, %41 : vector<16x128xf32>
    %cst_9 = arith.constant 5.000000e-01 : f32
    %43 = vector.broadcast %cst_9 : f32 to vector<16x1xf32>
    %44 = arith.mulf %43, %18 : vector<16x1xf32>
    %45 = arith.subf %16, %44 : vector<16x1xf32>
    %cst_10 = arith.constant 5.000000e-01 : f32
    %46 = vector.broadcast %cst_10 : f32 to vector<16x1xf32>
    %47 = arith.mulf %46, %19 : vector<16x1xf32>
    %48 = arith.subf %17, %47 : vector<16x1xf32>
    %cst_11 = arith.constant 5.000000e-01 : f32
    %49 = vector.broadcast %cst_11 : f32 to vector<16x1xf32>
    %50 = arith.mulf %49, %18 : vector<16x1xf32>
    %51 = arith.addf %16, %50 : vector<16x1xf32>
    %cst_12 = arith.constant 5.000000e-01 : f32
    %52 = vector.broadcast %cst_12 : f32 to vector<16x1xf32>
    %53 = arith.mulf %52, %19 : vector<16x1xf32>
    %54 = arith.addf %17, %53 : vector<16x1xf32>
    %cst_13 = arith.constant 5.000000e-01 : f32
    %55 = vector.broadcast %cst_13 : f32 to vector<1x128xf32>
    %56 = arith.mulf %55, %22 : vector<1x128xf32>
    %57 = arith.subf %20, %56 : vector<1x128xf32>
    %cst_14 = arith.constant 5.000000e-01 : f32
    %58 = vector.broadcast %cst_14 : f32 to vector<1x128xf32>
    %59 = arith.mulf %58, %23 : vector<1x128xf32>
    %60 = arith.subf %21, %59 : vector<1x128xf32>
    %cst_15 = arith.constant 5.000000e-01 : f32
    %61 = vector.broadcast %cst_15 : f32 to vector<1x128xf32>
    %62 = arith.mulf %61, %22 : vector<1x128xf32>
    %63 = arith.addf %20, %62 : vector<1x128xf32>
    %cst_16 = arith.constant 5.000000e-01 : f32
    %64 = vector.broadcast %cst_16 : f32 to vector<1x128xf32>
    %65 = arith.mulf %64, %23 : vector<1x128xf32>
    %66 = arith.addf %21, %65 : vector<1x128xf32>
    %67 = arith.subf %51, %45 : vector<16x1xf32>
    %68 = arith.subf %54, %48 : vector<16x1xf32>
    %69 = arith.mulf %67, %68 : vector<16x1xf32>
    %70 = arith.subf %63, %57 : vector<1x128xf32>
    %71 = arith.subf %66, %60 : vector<1x128xf32>
    %72 = arith.mulf %70, %71 : vector<1x128xf32>
    %73 = vector.broadcast %51 : vector<16x1xf32> to vector<16x128xf32>
    %74 = vector.broadcast %63 : vector<1x128xf32> to vector<16x128xf32>
    %75 = arith.minimumf %73, %74 : vector<16x128xf32>
    %76 = vector.broadcast %45 : vector<16x1xf32> to vector<16x128xf32>
    %77 = vector.broadcast %57 : vector<1x128xf32> to vector<16x128xf32>
    %78 = arith.maximumf %76, %77 : vector<16x128xf32>
    %79 = arith.subf %75, %78 : vector<16x128xf32>
    %cst_17 = arith.constant 0.000000e+00 : f32
    %80 = vector.broadcast %cst_17 : f32 to vector<16x128xf32>
    %81 = arith.maximumf %79, %80 : vector<16x128xf32>
    %82 = vector.broadcast %54 : vector<16x1xf32> to vector<16x128xf32>
    %83 = vector.broadcast %66 : vector<1x128xf32> to vector<16x128xf32>
    %84 = arith.minimumf %82, %83 : vector<16x128xf32>
    %85 = vector.broadcast %48 : vector<16x1xf32> to vector<16x128xf32>
    %86 = vector.broadcast %60 : vector<1x128xf32> to vector<16x128xf32>
    %87 = arith.maximumf %85, %86 : vector<16x128xf32>
    %88 = arith.subf %84, %87 : vector<16x128xf32>
    %cst_18 = arith.constant 0.000000e+00 : f32
    %89 = vector.broadcast %cst_18 : f32 to vector<16x128xf32>
    %90 = arith.maximumf %88, %89 : vector<16x128xf32>
    %91 = arith.mulf %81, %90 : vector<16x128xf32>
    %92 = vector.broadcast %69 : vector<16x1xf32> to vector<16x128xf32>
    %93 = vector.broadcast %72 : vector<1x128xf32> to vector<16x128xf32>
    %94 = arith.addf %92, %93 : vector<16x128xf32>
    %95 = arith.subf %94, %91 : vector<16x128xf32>
    %cst_19 = arith.constant 1.000000e-07 : f32
    %96 = vector.broadcast %cst_19 : f32 to vector<16x128xf32>
    %97 = arith.maximumf %95, %96 : vector<16x128xf32>
    %98 = tpu.reciprocal %97 {approx = true} : vector<16x128xf32> -> vector<16x128xf32>
    %99 = arith.mulf %91, %98 : vector<16x128xf32>
    %100 = vector.broadcast %51 : vector<16x1xf32> to vector<16x128xf32>
    %101 = vector.broadcast %63 : vector<1x128xf32> to vector<16x128xf32>
    %102 = arith.maximumf %100, %101 : vector<16x128xf32>
    %103 = vector.broadcast %45 : vector<16x1xf32> to vector<16x128xf32>
    %104 = vector.broadcast %57 : vector<1x128xf32> to vector<16x128xf32>
    %105 = arith.minimumf %103, %104 : vector<16x128xf32>
    %106 = arith.subf %102, %105 : vector<16x128xf32>
    %cst_20 = arith.constant 0.000000e+00 : f32
    %107 = vector.broadcast %cst_20 : f32 to vector<16x128xf32>
    %108 = arith.maximumf %106, %107 : vector<16x128xf32>
    %109 = vector.broadcast %54 : vector<16x1xf32> to vector<16x128xf32>
    %110 = vector.broadcast %66 : vector<1x128xf32> to vector<16x128xf32>
    %111 = arith.maximumf %109, %110 : vector<16x128xf32>
    %112 = vector.broadcast %48 : vector<16x1xf32> to vector<16x128xf32>
    %113 = vector.broadcast %60 : vector<1x128xf32> to vector<16x128xf32>
    %114 = arith.minimumf %112, %113 : vector<16x128xf32>
    %115 = arith.subf %111, %114 : vector<16x128xf32>
    %cst_21 = arith.constant 0.000000e+00 : f32
    %116 = vector.broadcast %cst_21 : f32 to vector<16x128xf32>
    %117 = arith.maximumf %115, %116 : vector<16x128xf32>
    %118 = arith.mulf %108, %117 : vector<16x128xf32>
    %cst_22 = arith.constant 1.000000e-07 : f32
    %119 = vector.broadcast %cst_22 : f32 to vector<16x128xf32>
    %120 = arith.maximumf %118, %119 : vector<16x128xf32>
    %121 = tpu.reciprocal %120 {approx = true} : vector<16x128xf32> -> vector<16x128xf32>
    %122 = arith.mulf %95, %121 : vector<16x128xf32>
    %cst_23 = arith.constant 1.000000e+00 : f32
    %123 = vector.broadcast %cst_23 : f32 to vector<16x128xf32>
    %124 = arith.mulf %123, %42 : vector<16x128xf32>
    %125 = arith.addf %124, %13 : vector<16x128xf32>
    %cst_24 = arith.constant 1.000000e+00 : f32
    %126 = vector.broadcast %cst_24 : f32 to vector<16x128xf32>
    %127 = arith.subf %126, %99 : vector<16x128xf32>
    %128 = arith.subf %127, %122 : vector<16x128xf32>
    %cst_25 = arith.constant 1.000000e+00 : f32
    %129 = vector.broadcast %cst_25 : f32 to vector<16x128xf32>
    %130 = arith.mulf %129, %128 : vector<16x128xf32>
    %131 = arith.addf %125, %130 : vector<16x128xf32>
    %c0_26 = arith.constant 0 : index
    %c0_27 = arith.constant 0 : index
    %132 = vector.load %arg5[%c0_26, %c0_27] : memref<16x128xf32, #tpu.memory_space<vmem>>, vector<16x128xf32>
    tpu.vector_store %arg5[%c0_26, %c0_27], %131 {strides = array<i32>} : memref<16x128xf32, #tpu.memory_space<vmem>>, vector<16x128xf32>,
    return
  }
  func.func @transform_0(%arg0: i32) -> (i32, i32) {
    %c0_i32 = arith.constant 0 : i32
    %c0_i32_0 = arith.constant 0 : i32
    return %arg0, %c0_i32 : i32, i32
  }
  func.func @transform_1(%arg0: i32) -> (i32, i32) {
    %c0_i32 = arith.constant 0 : i32
    %c0_i32_0 = arith.constant 0 : i32
    %c0_i32_1 = arith.constant 0 : i32
    return %c0_i32, %c0_i32_0 : i32, i32
  }
  func.func @transform_2(%arg0: i32) -> (i32, i32) {
    %c0_i32 = arith.constant 0 : i32
    %c0_i32_0 = arith.constant 0 : i32
    return %arg0, %c0_i32 : i32, i32
  }
  func.func @transform_3(%arg0: i32) -> (i32, i32) {
    %c0_i32 = arith.constant 0 : i32
    %c0_i32_0 = arith.constant 0 : i32
    %c0_i32_1 = arith.constant 0 : i32
    return %c0_i32, %c0_i32_0 : i32, i32
  }
  func.func @transform_4(%arg0: i32) -> (i32, i32) {
    %c0_i32 = arith.constant 0 : i32
    %c0_i32_0 = arith.constant 0 : i32
    return %arg0, %c0_i32 : i32, i32
  }
}

</mosaic_0001>

<llo_original>
// kernel: tpu_custom_call.1
$region0: #{tpu_custom_call.1}
  #allocation0 [shape = 'u32[]', space=smem, size = 0x4, offset = 0x4, fixed_abs, tag = 'smem constant byte address 0x4 - core index']
  #allocation1 [shape = 'u32[72,128]{1,0:T(1,128)}', space=vmem, size = 0x9000, scoped, tag = 'internal scratch']
  %s0 = inlined_call_operand.vmem [shape: f32[16,32], index: 0, kind: input, shape index: {}]
  %s1 = inlined_call_operand.hbm [shape: bf16[32,128], index: 1, kind: input, shape index: {}]
  %s2 = inlined_call_operand.vmem [shape: f32[16,4], index: 2, kind: input, shape index: {}]
  %s3 = inlined_call_operand.vmem [shape: f32[4,128], index: 3, kind: input, shape index: {}]
  %s4 = inlined_call_operand.hbm [shape: f32[16,128], index: 4, kind: output, shape index: {}]
  %s5 = sld [smem:[#allocation0]]
  $region30: #{tpu_custom_call.1} parent=0
    _
  %s7 = ssub.s32 1, %s5
  %s8 = scalar_select 0, %s7, %s5
  $region1: #{tpu_custom_call.1} parent=0
    #allocation2 [shape = 'u8[8192]{0}', space=vmem, size = 0x2000, scoped, tag = 'input window, operand 1, single buffered']
    #allocation3 [shape = 's32[1]{0}', space=sflag, size = 0x4, scoped, tag = 'scoped memory for tpu_custom_call.1']
    #allocation4 [shape = 's32[1]{0}', space=sflag, size = 0x4, scoped, tag = 'scoped memory for tpu_custom_call.1']
    #allocation5 [shape = 'u8[8192]{0}', space=vmem, size = 0x2000, scoped, tag = 'output window, operand 0, single buffered']
    %9 = vsyncpa [#allocation3], 0
    %10 = vsyncpa [#allocation4], 0
    // Predicated region
    $region2: #{tpu_custom_call.1} parent=1 // pred_check
      _
    $region3: #{tpu_custom_call.1} parent=1 // pred_check_branch
      %12 = sbr.rel (0) target = $region5
    $region4: #{tpu_custom_call.1} parent=1 // pred_region
      _
    $region5: #{tpu_custom_call.1} parent=1 // pred_fallthru
      _
    // Predicated region
    $region6: #{tpu_custom_call.1} parent=1 // pred_check
      _
    $region7: #{tpu_custom_call.1} parent=1 // pred_check_branch
      %14 = sbr.rel (0) target = $region9
    $region8: #{tpu_custom_call.1} parent=1 // pred_region
      %16 = vsyncadd [#allocation3], 0
      %s17 = sshll.u32 %s1, 4
      %s18 = int_to_ptr.hbm [resolvable:$true] %s17
      %s19 = sshll.u32 [#allocation2], 4
      %s20 = int_to_ptr.vmem [resolvable:$true] %s19
      %25 = dma.hbm_to_vmem [thread:$0]  %s18, 256, %s20, [#allocation3], 64, 64, 4
    $region9: #{tpu_custom_call.1} parent=1 // pred_fallthru
      _
    // Predicated region
    $region10: #{tpu_custom_call.1} parent=1 // pred_check
      _
    $region11: #{tpu_custom_call.1} parent=1 // pred_check_branch
      %27 = sbr.rel (0) target = $region13
    $region12: #{tpu_custom_call.1} parent=1 // pred_region
      _
    $region13: #{tpu_custom_call.1} parent=1 // pred_fallthru
      _
    // Predicated region
    $region14: #{tpu_custom_call.1} parent=1 // pred_check
      _
    $region15: #{tpu_custom_call.1} parent=1 // pred_check_branch
      %29 = sbr.rel (0) target = $region17
    $region16: #{tpu_custom_call.1} parent=1 // pred_region
      _
    $region17: #{tpu_custom_call.1} parent=1 // pred_fallthru
      _
    // Predicated region
    $region18: #{tpu_custom_call.1} parent=1 // pred_check
      _
    $region19: #{tpu_custom_call.1} parent=1 // pred_check_branch
      %31 = sbr.rel (0) target = $region21
    $region20: #{tpu_custom_call.1} parent=1 // pred_region
      %33 = dma.done [#allocation3], 256
    $region21: #{tpu_custom_call.1} parent=1 // pred_fallthru
      _
    %v35 = vld [vmem:[%s0] sm:$0xff]
    %v36 = vld [vmem:[%s0 + $0x8] sm:$0xff]
    %vm37 = vcmask 261120
    %v38 = vsel %vm37, %v35, -inf
    %39 = vmax.xlane.f32.xlu0 %v38
    %v40 = vpop.xlane.xlu0 %39
    %v41 = vsel %vm37, %v36, -inf
    %42 = vmax.xlane.f32.xlu0 %v41
    %v43 = vpop.xlane.xlu0 %42
    %v44 = vsub.f32 %v35, %v40
    %v45 = vsub.f32 %v36, %v43
    %v46 = vmul.f32 %v44, 1.442695
    %v47 = vpow.pop %v46
    %v48 = vmul.f32 %v45, 1.442695
    %v49 = vpow.pop %v48
    %v50 = vsel %vm37, %v47, 0.0
    %51 = vadd.xlane.f32.xlu0 %v50
    %v52 = vpop.xlane.xlu0 %51
    %v53 = vsel %vm37, %v49, 0.0
    %54 = vadd.xlane.f32.xlu0 %v53
    %v55 = vpop.xlane.xlu0 %54
    %v56 = vrcp.pop %v52
    %v57 = vrcp.pop %v55
    %v58 = vmul.f32 %v47, %v56
    %v59 = vmul.f32 %v49, %v57
    %v60 = vpack.c.bf16 %v59, %v58
    %v61 = vld [vmem:[#allocation2] sm:$0xf]
    %v62 = vld [vmem:[#allocation2 + $0x4] sm:$0xf]
    %v63 = vld [vmem:[#allocation2 + $0x8] sm:$0xf]
    %v64 = vld [vmem:[#allocation2 + $0xc] sm:$0xf]
    %v69 = vunpack.c.l.b16 %v61
    %v70 = vunpack.c.l.b16 %v62
    %v71 = vunpack.c.l.b16 %v63
    %v72 = vunpack.c.l.b16 %v64
    %v73 = vpack.c.b16 %v70, %v69
    %v74 = vpack.c.b16 %v72, %v71
    %v78 = vsel %vm37, %v60, 0
    %80 = vmatpush.bf16.msra.mxu0 0
    %81 = vmatpush.bf16.msra.mxu0 0
    %82 = vmatpush.bf16.msra.mxu0 0
    %83 = vmatpush.bf16.msra.mxu0 0
    %84 = vmatpush.bf16.msra.mxu0 0
    %85 = vmatpush.bf16.msra.mxu0 0
    %86 = vmatpush.bf16.msra.mxu0 %v74
    %87 = vmatpush.bf16.msra.mxu0 %v73
    %88 = vmatmul.bf16.gmra.mxu0 %v78
    %v89 = vpop.f32.mrf.mxu0
    %v90 = vadd.f32 0.0, %v89
    %v91 = vpop.f32.mrf.mxu0
    %v92 = vadd.f32 0.0, %v91
    %93 = vdwg.mxu0
    %v94 = vld [vmem:[%s2] sm:$0xff]
    %v95 = vld [vmem:[%s2 + $0x8] sm:$0xff]
    %v96 = vld [vmem:[%s3] sm:$0xf]
    %98 = vset.pattern.permute.xlu0 0
    %99 = vperm.xlu0 %98, %v94
    %v100 = vpop.permute.xlu0 %99
    %103 = vset.pattern.permute.xlu0 0
    %104 = vperm.xlu0 %103, %v95
    %v105 = vpop.permute.xlu0 %104
    %v107 = vperm.slane %v96, 0
    %v108 = vsub.f32 %v100, %v107
    %v109 = vsub.f32 %v105, %v107
    %v110 = vand.u32 2147483647, %v108
    %v111 = vand.u32 2147483647, %v109
    %112 = vset.pattern.permute.xlu0 1
    %113 = vperm.xlu0 %112, %v94
    %v114 = vpop.permute.xlu0 %113
    %116 = vset.pattern.permute.xlu0 1
    %117 = vperm.xlu0 %116, %v95
    %v118 = vpop.permute.xlu0 %117
    %v120 = vperm.slane %v96, 1
    %v121 = vsub.f32 %v114, %v120
    %v122 = vsub.f32 %v118, %v120
    %v123 = vand.u32 2147483647, %v121
    %v124 = vand.u32 2147483647, %v122
    %v125 = vadd.f32 %v110, %v123
    %v126 = vadd.f32 %v111, %v124
    %127 = vset.pattern.permute.xlu0 2
    %128 = vperm.xlu0 %127, %v94
    %v129 = vpop.permute.xlu0 %128
    %131 = vset.pattern.permute.xlu0 2
    %132 = vperm.xlu0 %131, %v95
    %v133 = vpop.permute.xlu0 %132
    %v135 = vperm.slane %v96, 2
    %v136 = vsub.f32 %v129, %v135
    %v137 = vsub.f32 %v133, %v135
    %v138 = vand.u32 2147483647, %v136
    %v139 = vand.u32 2147483647, %v137
    %v140 = vadd.f32 %v125, %v138
    %v141 = vadd.f32 %v126, %v139
    %142 = vset.pattern.permute.xlu0 3
    %143 = vperm.xlu0 %142, %v94
    %v144 = vpop.permute.xlu0 %143
    %146 = vset.pattern.permute.xlu0 3
    %147 = vperm.xlu0 %146, %v95
    %v148 = vpop.permute.xlu0 %147
    %v150 = vperm.slane %v96, 3
    %v151 = vsub.f32 %v144, %v150
    %v152 = vsub.f32 %v148, %v150
    %v153 = vand.u32 2147483647, %v151
    %v154 = vand.u32 2147483647, %v152
    %v155 = vadd.f32 %v140, %v153
    %v156 = vadd.f32 %v141, %v154
    %v157 = vmul.f32 %v94, 0.5
    %v158 = vmul.f32 %v95, 0.5
    %161 = vrot.lane.b32.xlu0 %v157, 126
    %v162 = vpop.permute.xlu0 %161
    %163 = vrot.lane.b32.xlu0 %v158, 126
    %v164 = vpop.permute.xlu0 %163
    %v167 = vsub.f32 %v94, %v162
    %v168 = vsub.f32 %v95, %v164
    %v169 = vadd.f32 %v94, %v162
    %v170 = vadd.f32 %v95, %v164
    %v171 = vmul.f32 %v96, 0.5
    %v173 = vrot.slane %v171, 2
    %v175 = vsub.f32 %v96, %v173
    %v176 = vadd.f32 %v96, %v173
    %v177 = vsub.f32 %v169, %v167
    %v178 = vsub.f32 %v170, %v168
    %181 = vrot.lane.b32.xlu0 %v177, 127
    %v182 = vpop.permute.xlu0 %181
    %183 = vrot.lane.b32.xlu0 %v178, 127
    %v184 = vpop.permute.xlu0 %183
    %v187 = vmul.f32 %v177, %v182
    %v188 = vmul.f32 %v178, %v184
    %v189 = vsub.f32 %v176, %v175
    %v191 = vrot.slane %v189, 1
    %v193 = vmul.f32 %v189, %v191
    %195 = vset.pattern.permute.xlu0 0
    %196 = vperm.xlu0 %195, %v169
    %v197 = vpop.permute.xlu0 %196
    %200 = vset.pattern.permute.xlu0 0
    %201 = vperm.xlu0 %200, %v170
    %v202 = vpop.permute.xlu0 %201
    %v204 = vperm.slane %v176, 0
    %v205 = vmin.f32 %v197, %v204
    %v206 = vmin.f32 %v202, %v204
    %208 = vset.pattern.permute.xlu0 0
    %209 = vperm.xlu0 %208, %v167
    %v210 = vpop.permute.xlu0 %209
    %213 = vset.pattern.permute.xlu0 0
    %214 = vperm.xlu0 %213, %v168
    %v215 = vpop.permute.xlu0 %214
    %v217 = vperm.slane %v175, 0
    %v218 = vmax.f32 %v210, %v217
    %v219 = vmax.f32 %v215, %v217
    %v220 = vsub.f32 %v205, %v218
    %v221 = vsub.f32 %v206, %v219
    %v222 = vmax.f32 %v220, 0.0
    %v223 = vmax.f32 %v221, 0.0
    %224 = vset.pattern.permute.xlu0 1
    %225 = vperm.xlu0 %224, %v169
    %v226 = vpop.permute.xlu0 %225
    %228 = vset.pattern.permute.xlu0 1
    %229 = vperm.xlu0 %228, %v170
    %v230 = vpop.permute.xlu0 %229
    %v232 = vperm.slane %v176, 1
    %v233 = vmin.f32 %v226, %v232
    %v234 = vmin.f32 %v230, %v232
    %235 = vset.pattern.permute.xlu0 1
    %236 = vperm.xlu0 %235, %v167
    %v237 = vpop.permute.xlu0 %236
    %239 = vset.pattern.permute.xlu0 1
    %240 = vperm.xlu0 %239, %v168
    %v241 = vpop.permute.xlu0 %240
    %v243 = vperm.slane %v175, 1
    %v244 = vmax.f32 %v237, %v243
    %v245 = vmax.f32 %v241, %v243
    %v246 = vsub.f32 %v233, %v244
    %v247 = vsub.f32 %v234, %v245
    %v248 = vmax.f32 %v246, 0.0
    %v249 = vmax.f32 %v247, 0.0
    %v250 = vmul.f32 %v222, %v248
    %v251 = vmul.f32 %v223, %v249
    %253 = vset.pattern.permute.xlu0 0
    %254 = vperm.xlu0 %253, %v187
    %v255 = vpop.permute.xlu0 %254
    %258 = vset.pattern.permute.xlu0 0
    %259 = vperm.xlu0 %258, %v188
    %v260 = vpop.permute.xlu0 %259
    %v262 = vperm.slane %v193, 0
    %v263 = vadd.f32 %v255, %v262
    %v264 = vadd.f32 %v260, %v262
    %v265 = vsub.f32 %v263, %v250
    %v266 = vsub.f32 %v264, %v251
    %v267 = vmax.f32 %v265, 1e-07
    %v268 = vmax.f32 %v266, 1e-07
    %v269 = vrcp.pop %v267
    %v270 = vrcp.pop %v268
    %v271 = vmul.f32 %v250, %v269
    %v272 = vmul.f32 %v251, %v270
    %v273 = vmax.f32 %v197, %v204
    %v274 = vmax.f32 %v202, %v204
    %v275 = vmin.f32 %v210, %v217
    %v276 = vmin.f32 %v215, %v217
    %v277 = vsub.f32 %v273, %v275
    %v278 = vsub.f32 %v274, %v276
    %v279 = vmax.f32 %v277, 0.0
    %v280 = vmax.f32 %v278, 0.0
    %v281 = vmax.f32 %v226, %v232
    %v282 = vmax.f32 %v230, %v232
    %v283 = vmin.f32 %v237, %v243
    %v284 = vmin.f32 %v241, %v243
    %v285 = vsub.f32 %v281, %v283
    %v286 = vsub.f32 %v282, %v284
    %v287 = vmax.f32 %v285, 0.0
    %v288 = vmax.f32 %v286, 0.0
    %v289 = vmul.f32 %v279, %v287
    %v290 = vmul.f32 %v280, %v288
    %v291 = vmax.f32 %v289, 1e-07
    %v292 = vmax.f32 %v290, 1e-07
    %v293 = vrcp.pop %v291
    %v294 = vrcp.pop %v292
    %v295 = vmul.f32 %v265, %v293
    %v296 = vmul.f32 %v266, %v294
    %v297 = vadd.f32 %v155, %v90
    %v298 = vadd.f32 %v156, %v92
    %v299 = vsub.f32 1.0, %v271
    %v300 = vsub.f32 1.0, %v272
    %v301 = vsub.f32 %v299, %v295
    %v302 = vsub.f32 %v300, %v296
    %v303 = vadd.f32 %v297, %v301
    %v304 = vadd.f32 %v298, %v302
    %305 = vst [vmem:[#allocation5] sm:$0xff] %v303
    %306 = vst [vmem:[#allocation5 + $0x8] sm:$0xff] %v304
    // Predicated region
    $region22: #{tpu_custom_call.1} parent=1 // pred_check
      _
    $region23: #{tpu_custom_call.1} parent=1 // pred_check_branch
      %308 = sbr.rel (0) target = $region25
    $region24: #{tpu_custom_call.1} parent=1 // pred_region
      %310 = vsyncadd [#allocation4], 0
      %s311 = sshll.u32 [#allocation5], 4
      %s312 = int_to_ptr.vmem [resolvable:$true] %s311
      %s313 = sshll.u32 %s4, 4
      %s314 = int_to_ptr.hbm [resolvable:$true] %s313
      %319 = dma.vmem_to_hbm [thread:$0]  %s312, 256, %s314, [#allocation4], 128, 128, 8
    $region25: #{tpu_custom_call.1} parent=1 // pred_fallthru
      _
    // Predicated region
    $region26: #{tpu_custom_call.1} parent=1 // pred_check
      _
    $region27: #{tpu_custom_call.1} parent=1 // pred_check_branch
      %321 = sbr.rel (0) target = $region29
    $region28: #{tpu_custom_call.1} parent=1 // pred_region
      %323 = dma.done [#allocation4], 256
    $region29: #{tpu_custom_call.1} parent=1 // pred_fallthru
      _
    %324 = vsyncpa [#allocation3], 1
    %325 = vsyncpa [#allocation4], 1

</llo_original>
